<compile_context>
chip_gen: v7x
topology: tpu7x:2x2x1
jax: 0.10.0
libtpu: 0.0.40
codegen_flags: <defaults>
</compile_context>

<pallas_src>
import math

import jax
import jax.numpy as jnp
from jax.experimental import pallas as pl
from jax.experimental.pallas import tpu as pltpu


_LANE = 128           # lane-dense last dim; maximizes the free-reshape hit rate
_MAX_TILE_ROWS = 4096  # 4096 x 128 x 4 B = 2 MiB per f32 array per block


def _round_up(n, m):
    return ((n + m - 1) // m) * m


def _ceil_div(a, b):
    return -(-a // b)


def _make_kernel(q_n, q_p, round_dtype, store_whole):
    q_n = float(q_n)
    q_p = float(q_p)
    round_is_int = jnp.issubdtype(jnp.dtype(round_dtype), jnp.integer)

    def kernel(step_ref, x_ref, *out_refs):
        xout_ref = out_refs[0]
        xround_ref = out_refs[1]
        step_scale = step_ref[0]                       # |step| scalar from SMEM
        x = x_ref[...].astype(jnp.float32)             # read native dtype, math in f32
        # True division (not reciprocal-multiply): matches torch `x / step`
        # exactly at clamp / round-half-to-even boundaries.
        x_whole = jnp.clip(x / step_scale, q_n, q_p)
        x_round = jnp.round(x_whole)                   # round-half-to-even == torch.round
        xout_ref[...] = x_round * step_scale
        if round_is_int:
            # Exact: x_round values are already integers in [q_n, q_p].
            xround_ref[...] = x_round.astype(jnp.int32).astype(round_dtype)
        else:
            xround_ref[...] = x_round.astype(round_dtype)
        if store_whole:
            out_refs[2][...] = x_whole

    return kernel


def lsq_forward(x, step, q_n, q_p, *, round_dtype=None, store_whole=True):
    """LSQ forward (values only; grad_scale / round_pass are identity on values).

    Returns (x_out, step_scale, x_round, x_whole):
      x_out      : float32, shape of x
      step_scale : float32, shape (1,)  (= |step|; grad scaling is gradient-only)
      x_round    : shape of x; int8 by default when [q_n, q_p] fits in int8
                   (values identical to torch's float output - cast if needed)
      x_whole    : float32, shape of x, or None when store_whole=False
                   (callers that recompute it in backward save 4 B/elem of HBM writes)
    """
    orig_shape = x.shape
    n_elem = x.size

    if round_dtype is None:
        round_dtype = jnp.int8 if (q_n >= -128 and q_p <= 127) else jnp.float32
    round_dtype = jnp.dtype(round_dtype)

    # Lane-dense (rows, 128) view of the flat array. This is a free bitcast
    # whenever n_elem % 128 == 0 (the common case for NCHW activations), so no
    # wrapper-side HBM copies are added for input or outputs.
    x_flat = x.reshape(-1)
    n_padded = _round_up(n_elem, _LANE)
    padded = n_padded != n_elem
    if padded:
        # TODO(synk): odd sizes (n_elem % 128 != 0) still pay one pad copy plus
        # per-output slice copies; a 1-D-block kernel would remove them at the
        # cost of a less efficient 1-D vector layout on the VPU.
        x_flat = jnp.pad(x_flat, (0, n_padded - n_elem))
    rows = n_padded // _LANE
    x2d = x_flat.reshape(rows, _LANE)

    # Tile rows: up to 2 MiB/array, multiple of 32 (int8/bf16 sublane tiling),
    # and split into >= 2 grid steps whenever the input allows so both v7x
    # TensorCores get work on the "parallel" axis.  Small inputs get a single
    # block equal to the full array (always a legal block shape, no masking).
    half = _round_up(_ceil_div(rows, 2), 32)
    if half < rows:
        tile_rows = min(_MAX_TILE_ROWS, half)
    else:
        tile_rows = rows
    grid = (pl.cdiv(rows, tile_rows),)   # partial last block is masked by Pallas

    # Scalar prep hoisted out of the kernel.
    step_scale = jnp.abs(step).astype(jnp.float32).reshape((1,))

    tile_spec = pl.BlockSpec((tile_rows, _LANE), lambda i: (i, 0))

    out_shapes = [
        jax.ShapeDtypeStruct((rows, _LANE), jnp.float32),   # x_out
        jax.ShapeDtypeStruct((rows, _LANE), round_dtype),   # x_round (int8 default)
    ]
    if store_whole:
        out_shapes.append(jax.ShapeDtypeStruct((rows, _LANE), jnp.float32))

    kernel = _make_kernel(q_n, q_p, round_dtype, store_whole)

    outs = pl.pallas_call(
        kernel,
        out_shape=tuple(out_shapes),
        grid_spec=pltpu.PrefetchScalarGridSpec(
            num_scalar_prefetch=0,
            grid=grid,
            in_specs=[
                pl.BlockSpec(memory_space=pltpu.SMEM),  # |step| scalar
                tile_spec,                              # x tile (native dtype)
            ],
            out_specs=[tile_spec] * len(out_shapes),
        ),
        compiler_params=pltpu.CompilerParams(
            # Row tiles are independent -> megacore sharding on v7x (2 TCs).
            dimension_semantics=("parallel",),
            # Needed on v5e (16 MiB default scoped VMEM) for the ~13-16 MiB
            # double-buffered footprint of 2 MiB tiles; fine on v6e/v7x.
            vmem_limit_bytes=32 << 20,
        ),
    )(step_scale, x2d)

    def _unflatten(a):
        if padded:
            a = a.reshape(-1)[:n_elem]
        return a.reshape(orig_shape)

    x_out = _unflatten(outs[0])
    x_round = _unflatten(outs[1])
    x_whole = _unflatten(outs[2]) if store_whole else None
    return x_out, step_scale, x_round, x_whole


def _reference(x, step, q_n, q_p):
    ss = jnp.abs(step)[0]
    whole = jnp.clip(x / ss, q_n, q_p)
    rnd = jnp.round(whole)
    return rnd * ss, rnd, whole


if __name__ == "__main__":
    # LSQ(nbits=4, q_n=-8, q_p=7) style config
    nbits = 4
    q_n = -(2 ** (nbits - 1))        # -8
    q_p = 2 ** (nbits - 1) - 1       # 7

    key = jax.random.PRNGKey(0)
    kx, ky = jax.random.split(key)

    # NCHW activation.
    x = jax.random.normal(kx, (2, 4, 16, 16), dtype=jnp.float32)
    # Deterministic "init_step": step = 2 * mean(|x|) / sqrt(q_p), shape (1,)
    step = (2.0 * jnp.mean(jnp.abs(x)) / math.sqrt(q_p)).reshape((1,))

    x_out, step_scale, x_round, x_whole = lsq_forward(x, step, q_n, q_p)
    jax.block_until_ready((x_out, step_scale, x_round, x_whole))

    ref_out, ref_round, ref_whole = _reference(x, step, q_n, q_p)
    assert step_scale.shape == (1,)
    assert x_round.dtype == jnp.int8          # slimmed writeback (values exact)
    assert jnp.allclose(x_whole, ref_whole, atol=1e-6)
    assert jnp.allclose(x_round.astype(jnp.float32), ref_round, atol=1e-6)
    assert jnp.allclose(x_out, ref_out, atol=1e-6)

    # Misaligned size (exercises the pad fallback path).
    x2 = jax.random.normal(ky, (3, 5, 7, 11), dtype=jnp.float32)  # 1155 elems
    step2 = (2.0 * jnp.mean(jnp.abs(x2)) / math.sqrt(q_p)).reshape((1,))
    o2, s2, r2, w2 = lsq_forward(x2, step2, q_n, q_p)
    jax.block_until_ready((o2, s2, r2, w2))
    ro2, rr2, rw2 = _reference(x2, step2, q_n, q_p)
    assert jnp.allclose(w2, rw2, atol=1e-6)
    assert jnp.allclose(r2.astype(jnp.float32), rr2, atol=1e-6)
    assert jnp.allclose(o2, ro2, atol=1e-6)

    # Slimmed variant: no x_whole writeback (for consumers that recompute it
    # in the backward kernel).
    o3, s3, r3, w3 = lsq_forward(x, step, q_n, q_p, store_whole=False)
    jax.block_until_ready((o3, r3))
    assert w3 is None
    assert jnp.allclose(o3, ref_out, atol=1e-6)
    assert jnp.allclose(r3.astype(jnp.float32), ref_round, atol=1e-6)

    # Torch-identical dtypes variant (x_round as float32).
    o4, s4, r4, w4 = lsq_forward(x, step, q_n, q_p, round_dtype=jnp.float32)
    jax.block_until_ready((o4, r4, w4))
    assert r4.dtype == jnp.float32
    assert jnp.allclose(r4, ref_round, atol=1e-6)
    assert jnp.allclose(o4, ref_out, atol=1e-6)

    print("KERNEL_OK")
</pallas_src>

<mosaic_0001>
module attributes {stable_mosaic.version = 11 : i64} {
  func.func @kernel(%arg0: i32, %arg1: memref<1xf32, #tpu.memory_space<smem>>, %arg2: memref<16x128xf32, #tpu.memory_space<vmem>>, %arg3: memref<16x128xf32, #tpu.memory_space<vmem>>, %arg4: memref<16x128xi8, #tpu.memory_space<vmem>>, %arg5: memref<16x128xf32, #tpu.memory_space<vmem>>) attributes {dimension_semantics = [#tpu.dimension_semantics<parallel>], iteration_bounds = array<i64: 1>, scalar_prefetch = 0 : i64, scratch_operands = 0 : i64, tpu.core_type = #tpu.core_type<tc>, window_params = [{transform_indices = @transform_0, window_bounds = array<i64: 1>}, {transform_indices = @transform_1, window_bounds = array<i64: 16, 128>}, {transform_indices = @transform_2, window_bounds = array<i64: 16, 128>}, {transform_indices = @transform_3, window_bounds = array<i64: 16, 128>}, {transform_indices = @transform_4, window_bounds = array<i64: 16, 128>}]} {
    %c0 = arith.constant 0 : index
    %0 = memref.load %arg1[%c0] : memref<1xf32, #tpu.memory_space<smem>>
    %c0_0 = arith.constant 0 : index
    %c0_1 = arith.constant 0 : index
    %1 = vector.load %arg2[%c0_0, %c0_1] : memref<16x128xf32, #tpu.memory_space<vmem>>, vector<16x128xf32>
    %2 = vector.broadcast %0 : f32 to vector<16x128xf32>
    %3 = arith.divf %1, %2 : vector<16x128xf32>
    %cst = arith.constant -8.000000e+00 : f32
    %cst_2 = arith.constant 7.000000e+00 : f32
    %4 = vector.broadcast %cst : f32 to vector<16x128xf32>
    %5 = arith.maximumf %4, %3 : vector<16x128xf32>
    %6 = vector.broadcast %cst_2 : f32 to vector<16x128xf32>
    %7 = arith.minimumf %6, %5 : vector<16x128xf32>
    %8 = math.roundeven %7 : vector<16x128xf32>
    %9 = vector.broadcast %0 : f32 to vector<16x128xf32>
    %10 = arith.mulf %8, %9 : vector<16x128xf32>
    %c0_3 = arith.constant 0 : index
    %c0_4 = arith.constant 0 : index
    %11 = vector.load %arg3[%c0_3, %c0_4] : memref<16x128xf32, #tpu.memory_space<vmem>>, vector<16x128xf32>
    tpu.vector_store %arg3[%c0_3, %c0_4], %10 {strides = array<i32>} : memref<16x128xf32, #tpu.memory_space<vmem>>, vector<16x128xf32>,
    %12 = arith.fptosi %8 : vector<16x128xf32> to vector<16x128xi32>
    %13 = arith.trunci %12 : vector<16x128xi32> to vector<16x128xi8>
    %c0_5 = arith.constant 0 : index
    %c0_6 = arith.constant 0 : index
    %14 = vector.load %arg4[%c0_5, %c0_6] : memref<16x128xi8, #tpu.memory_space<vmem>>, vector<16x128xi8>
    tpu.vector_store %arg4[%c0_5, %c0_6], %13 {strides = array<i32>} : memref<16x128xi8, #tpu.memory_space<vmem>>, vector<16x128xi8>,
    %c0_7 = arith.constant 0 : index
    %c0_8 = arith.constant 0 : index
    %15 = vector.load %arg5[%c0_7, %c0_8] : memref<16x128xf32, #tpu.memory_space<vmem>>, vector<16x128xf32>
    tpu.vector_store %arg5[%c0_7, %c0_8], %7 {strides = array<i32>} : memref<16x128xf32, #tpu.memory_space<vmem>>, vector<16x128xf32>,
    return
  }
  func.func @transform_0(%arg0: i32) -> i32 {
    %c0_i32 = arith.constant 0 : i32
    %c0_i32_0 = arith.constant 0 : i32
    return %c0_i32 : i32
  }
  func.func @transform_1(%arg0: i32) -> (i32, i32) {
    %c0_i32 = arith.constant 0 : i32
    %c0_i32_0 = arith.constant 0 : i32
    return %arg0, %c0_i32 : i32, i32
  }
  func.func @transform_2(%arg0: i32) -> (i32, i32) {
    %c0_i32 = arith.constant 0 : i32
    %c0_i32_0 = arith.constant 0 : i32
    return %arg0, %c0_i32 : i32, i32
  }
  func.func @transform_3(%arg0: i32) -> (i32, i32) {
    %c0_i32 = arith.constant 0 : i32
    %c0_i32_0 = arith.constant 0 : i32
    return %arg0, %c0_i32 : i32, i32
  }
  func.func @transform_4(%arg0: i32) -> (i32, i32) {
    %c0_i32 = arith.constant 0 : i32
    %c0_i32_0 = arith.constant 0 : i32
    return %arg0, %c0_i32 : i32, i32
  }
}

</mosaic_0001>

<llo_original>
// kernel: tpu_custom_call.1
$region0: #{tpu_custom_call.1}
  #allocation0 [shape = 'u32[]', space=smem, size = 0x4, offset = 0x4, fixed_abs, tag = 'smem constant byte address 0x4 - core index']
  #allocation1 [shape = 'u32[144,128]{1,0:T(1,128)}', space=vmem, size = 0x12000, scoped, tag = 'internal scratch']
  #allocation2 [shape = 'f32[1]{0:T(128)S(6)}', space=smem, size = 0x200, scoped, tag = 'scoped memory for tpu_custom_call.1']
  %s0 = inlined_call_operand.<no memory space> [shape: f32[1], index: 0, kind: input, shape index: {}]
  %s1 = inlined_call_operand.hbm [shape: f32[16,128], index: 1, kind: input, shape index: {}]
  %s2 = inlined_call_operand.hbm [shape: f32[16,128], index: 2, kind: output, shape index: {0}]
  %s3 = inlined_call_operand.hbm [shape: s8[16,128], index: 3, kind: output, shape index: {1}]
  %s4 = inlined_call_operand.hbm [shape: f32[16,128], index: 4, kind: output, shape index: {2}]
  %5 = xla_tuple %s2, %s3, %s4
  %s6 = sld [smem:[#allocation0]]
  $region38: #{tpu_custom_call.1} parent=0
    _
  %s8 = ssub.s32 1, %s6
  %s9 = scalar_select 0, %s8, %s6
  %10 = sst [smem:[#allocation2]] %s0
  $region1: #{tpu_custom_call.1} parent=0
    #allocation3 [shape = 'u8[8192]{0}', space=vmem, size = 0x2000, scoped, tag = 'input window, operand 1, single buffered']
    #allocation4 [shape = 's32[1]{0}', space=sflag, size = 0x4, scoped, tag = 'scoped memory for tpu_custom_call.1']
    #allocation5 [shape = 's32[1]{0}', space=sflag, size = 0x4, scoped, tag = 'scoped memory for tpu_custom_call.1']
    #allocation6 [shape = 'u8[8192]{0}', space=vmem, size = 0x2000, scoped, tag = 'output window, operand 0, single buffered']
    #allocation7 [shape = 'u8[2048]{0}', space=vmem, size = 0x800, scoped, tag = 'output window, operand 1, single buffered']
    #allocation8 [shape = 's32[1]{0}', space=sflag, size = 0x4, scoped, tag = 'scoped memory for tpu_custom_call.1']
    #allocation9 [shape = 'u8[8192]{0}', space=vmem, size = 0x2000, scoped, tag = 'output window, operand 2, single buffered']
    %11 = vsyncpa [#allocation4], 0
    %12 = vsyncpa [#allocation5], 0
    %13 = vsyncpa [#allocation8], 0
    // Predicated region
    $region2: #{tpu_custom_call.1} parent=1 // pred_check
      _
    $region3: #{tpu_custom_call.1} parent=1 // pred_check_branch
      %15 = sbr.rel (0) target = $region5
    $region4: #{tpu_custom_call.1} parent=1 // pred_region
      _
    $region5: #{tpu_custom_call.1} parent=1 // pred_fallthru
      _
    // Predicated region
    $region6: #{tpu_custom_call.1} parent=1 // pred_check
      _
    $region7: #{tpu_custom_call.1} parent=1 // pred_check_branch
      %17 = sbr.rel (0) target = $region9
    $region8: #{tpu_custom_call.1} parent=1 // pred_region
      %s19 = ssub.s32 256, 256
      %20 = vsyncadd [#allocation4], %s19
      %s21 = sshll.u32 [#allocation3], 4
      %s22 = int_to_ptr.vmem [resolvable:$true] %s21
      %27 = dma.hbm_to_vmem [thread:$0]  %s1, 256, %s22, [#allocation4], 128, 128, 8
    $region9: #{tpu_custom_call.1} parent=1 // pred_fallthru
      _
    // Predicated region
    $region10: #{tpu_custom_call.1} parent=1 // pred_check
      _
    $region11: #{tpu_custom_call.1} parent=1 // pred_check_branch
      %29 = sbr.rel (0) target = $region13
    $region12: #{tpu_custom_call.1} parent=1 // pred_region
      %30 = dma.done [#allocation4], 256
    $region13: #{tpu_custom_call.1} parent=1 // pred_fallthru
      _
    %s31 = sld [smem:[#allocation2]]
    %v32 = vld [vmem:[#allocation3] sm:$0xff]
    %v33 = vld [vmem:[#allocation3 + $0x8] sm:$0xff]
    %v34 = vstv %s31
    %v35 = vrcp.pop %v34
    %v36 = vmul.f32 %v32, %v35
    %v37 = vmul.f32 %v33, %v35
    %v38 = vmax.f32 %v36, -8.0
    %v39 = vmax.f32 %v37, -8.0
    %v40 = vmin.f32 %v38, 7.0
    %v41 = vmin.f32 %v39, 7.0
    %v42 = vround.ne.pseudo %v40
    %v43 = vround.ne.pseudo %v41
    %v44 = vmul.f32 %v42, %v34
    %v45 = vmul.f32 %v43, %v34
    %46 = vst [vmem:[#allocation6] sm:$0xff] %v44
    %47 = vst [vmem:[#allocation6 + $0x8] sm:$0xff] %v45
    %v48 = vcvt.f32.s32.ties.to.even %v40
    %v49 = vcvt.f32.s32.ties.to.even %v41
    %v50 = vpack.c.b16 %v48, %v48
    %v51 = vpack.c.b8 %v50, %v50
    %v52 = vpack.c.b16 %v49, %v49
    %v53 = vpack.c.b8 %v52, %v52
    %54 = vst [vmem:[#allocation7] sm:$0x3] %v51
    %55 = vst [vmem:[#allocation7 + $0x2] sm:$0x3] %v53
    %56 = vst [vmem:[#allocation9] sm:$0xff] %v40
    %57 = vst [vmem:[#allocation9 + $0x8] sm:$0xff] %v41
    // Predicated region
    $region14: #{tpu_custom_call.1} parent=1 // pred_check
      _
    $region15: #{tpu_custom_call.1} parent=1 // pred_check_branch
      %59 = sbr.rel (0) target = $region17
    $region16: #{tpu_custom_call.1} parent=1 // pred_region
      %s61 = ssub.s32 256, 256
      %62 = vsyncadd [#allocation5], %s61
      %s63 = sshll.u32 [#allocation6], 4
      %s64 = int_to_ptr.vmem [resolvable:$true] %s63
      %69 = dma.vmem_to_hbm [thread:$0]  %s64, 256, %s2, [#allocation5], 128, 128, 8
    $region17: #{tpu_custom_call.1} parent=1 // pred_fallthru
      _
    // Predicated region
    $region18: #{tpu_custom_call.1} parent=1 // pred_check
      _
    $region19: #{tpu_custom_call.1} parent=1 // pred_check_branch
      %71 = sbr.rel (0) target = $region21
    $region20: #{tpu_custom_call.1} parent=1 // pred_region
      %s73 = ssub.s32 64, 64
      %74 = vsyncadd [#allocation8], %s73
      %s75 = sshll.u32 [#allocation7], 4
      %s76 = int_to_ptr.vmem [resolvable:$true] %s75
      %81 = dma.vmem_to_hbm [thread:$0]  %s76, 64, %s3, [#allocation8], 32, 32, 2
    $region21: #{tpu_custom_call.1} parent=1 // pred_fallthru
      _
    // Predicated region
    $region22: #{tpu_custom_call.1} parent=1 // pred_check
      _
    $region23: #{tpu_custom_call.1} parent=1 // pred_check_branch
      %83 = sbr.rel (0) target = $region25
    $region24: #{tpu_custom_call.1} parent=1 // pred_region
      %s85 = ssub.s32 256, 256
      %86 = vsyncadd [#allocation8], %s85
      %s87 = sshll.u32 [#allocation9], 4
      %s88 = int_to_ptr.vmem [resolvable:$true] %s87
      %93 = dma.vmem_to_hbm [thread:$0]  %s88, 256, %s4, [#allocation8], 128, 128, 8
    $region25: #{tpu_custom_call.1} parent=1 // pred_fallthru
      _
    // Predicated region
    $region26: #{tpu_custom_call.1} parent=1 // pred_check
      _
    $region27: #{tpu_custom_call.1} parent=1 // pred_check_branch
      %95 = sbr.rel (0) target = $region29
    $region28: #{tpu_custom_call.1} parent=1 // pred_region
      %96 = dma.done [#allocation5], 256
    $region29: #{tpu_custom_call.1} parent=1 // pred_fallthru
      _
    // Predicated region
    $region30: #{tpu_custom_call.1} parent=1 // pred_check
      _
    $region31: #{tpu_custom_call.1} parent=1 // pred_check_branch
      %98 = sbr.rel (0) target = $region33
    $region32: #{tpu_custom_call.1} parent=1 // pred_region
      %99 = dma.done [#allocation8], 64
    $region33: #{tpu_custom_call.1} parent=1 // pred_fallthru
      _
    // Predicated region
    $region34: #{tpu_custom_call.1} parent=1 // pred_check
      _
    $region35: #{tpu_custom_call.1} parent=1 // pred_check_branch
      %101 = sbr.rel (0) target = $region37
    $region36: #{tpu_custom_call.1} parent=1 // pred_region
      %102 = dma.done [#allocation8], 256
    $region37: #{tpu_custom_call.1} parent=1 // pred_fallthru
      _
    %103 = vsyncpa [#allocation4], 1
    %104 = vsyncpa [#allocation5], 1
    %105 = vsyncpa [#allocation8], 1

</llo_original>
